<compile_context>
chip_gen: v6e
topology: v6e:2x2x1
jax: 0.10.0
libtpu: 0.0.40
codegen_flags: <defaults>
</compile_context>

<pallas_src>
import jax
import jax.numpy as jnp
from jax.experimental import pallas as pl
from jax.experimental.pallas import tpu as pltpu


def _round_up(v, m):
    return ((v + m - 1) // m) * m


def graphsage_kernel(x_ref, at_ref, wt_ref, b_ref, o_ref):
    """One (node-tile, slice-block) grid step.

    x_ref : (s_blk*F_pad, N_pad)   bf16  s_blk feature slabs stacked along rows
    at_ref: (N_pad, tile_n)        bf16  column block of A_hat^T (reused over slices)
    wt_ref: (O_pad, F_pad)         f32   W^T (resident)
    b_ref : (O_pad, 1)             f32   bias (lane-broadcast)
    o_ref : (s_blk, O_pad, tile_n)       output block (nodes on lanes -> dense stores)
    """
    s_blk, _, _ = o_ref.shape
    f_pad = wt_ref.shape[1]

    # Aggregation matmul with all s_blk slices batched into M (MXU-friendly).
    z = jnp.dot(x_ref[...], at_ref[...],
                preferred_element_type=jnp.float32)          # (s_blk*F_pad, tile_n) f32

    bias = b_ref[...]                                        # (O_pad, 1) f32
    # Tiny per-slice projection (K = F_pad), kept in f32 to avoid rounding the
    # intermediate z to bf16 a second time.  Static unroll over s_blk.
    for s in range(s_blk):
        zs = z[s * f_pad:(s + 1) * f_pad, :]                 # (F_pad, tile_n) f32
        ys = jnp.dot(wt_ref[...], zs,
                     preferred_element_type=jnp.float32)     # (O_pad, tile_n) f32
        o_ref[s] = jnp.maximum(ys + bias, 0.0).astype(o_ref.dtype)   # bias + ReLU


def prepare_graphsage_params(a_hat, w, b, *, tile_n=512,
                             compute_dtype=jnp.bfloat16,
                             assume_symmetric_norm=True):
    """Pad/cast call-invariant operands once (kept out of the per-call hot path)."""
    N = a_hat.shape[0]
    F, O = w.shape

    tile_n = _round_up(min(tile_n, _round_up(N, 128)), 128)
    n_pad = _round_up(N, tile_n)
    # Keep the double-buffered A_hat^T column block inside a conservative VMEM
    # budget (v7x: 64 MiB physical / 32 MiB scoped default).
    while tile_n > 128 and 2 * n_pad * tile_n * 2 > (8 << 20):
        tile_n //= 2

    f_pad = _round_up(F, 16)   # bf16 sublane packing -> multiples of 16
    o_pad = _round_up(O, 16)

    # norm='both' => A_hat = D^-1/2 (A+I) D^-1/2 is symmetric, so A_hat^T == A_hat
    # and the explicit N^2 transpose copy is skipped.
    at_src = a_hat if assume_symmetric_norm else a_hat.T
    atp = jnp.zeros((n_pad, n_pad), compute_dtype).at[:N, :N].set(
        at_src.astype(compute_dtype))
    # W^T / bias stay f32: the second matmul is tiny and f32 avoids double rounding.
    wtp = jnp.zeros((o_pad, f_pad), jnp.float32).at[:O, :F].set(
        w.T.astype(jnp.float32))
    bp = jnp.zeros((o_pad, 1), jnp.float32).at[:O, 0].set(b.astype(jnp.float32))

    meta = dict(N=N, F=F, O=O, n_pad=n_pad, f_pad=f_pad, o_pad=o_pad, tile_n=tile_n)
    return (atp, wtp, bp), meta


def graphsage_forward(x, params, meta, *, compute_dtype=jnp.bfloat16,
                      out_dtype=jnp.float32, target_m=256):
    """x: (S, F, N) -> ReLU(A_hat @ x[s]^T @ W + b)^T stacked over s: (S, O, N)."""
    atp, wtp, bp = params
    N, F, O = meta["N"], meta["F"], meta["O"]
    n_pad, f_pad, o_pad = meta["n_pad"], meta["f_pad"], meta["o_pad"]
    tile_n = meta["tile_n"]
    S = x.shape[0]

    # Batch slices into the aggregation matmul's M dimension for MXU utilization.
    s_blk = max(1, min(S, target_m // f_pad))
    while s_blk > 1 and 2 * s_blk * f_pad * n_pad * 2 > (8 << 20):   # VMEM guard
        s_blk //= 2
    s_pad = _round_up(S, s_blk)

    # Single fused pad+cast for x; padded rows/cols contribute exact zeros.
    # TODO(synk): for very large x a masked last node tile would avoid this copy.
    xp = jnp.zeros((s_pad, f_pad, n_pad), compute_dtype).at[:S, :F, :N].set(
        x.astype(compute_dtype))
    xp2d = xp.reshape(s_pad * f_pad, n_pad)       # contiguous reshape, no copy

    num_n_tiles = n_pad // tile_n
    num_s_blocks = s_pad // s_blk

    out = pl.pallas_call(
        graphsage_kernel,
        out_shape=jax.ShapeDtypeStruct((s_pad, o_pad, n_pad), out_dtype),
        grid_spec=pltpu.PrefetchScalarGridSpec(
            num_scalar_prefetch=0,
            # Node-tile axis OUTERMOST: each A_hat^T column block is fetched once
            # and reused for every slice block; the leading "parallel" axis also
            # gives both TensorCores disjoint halves of A_hat^T on megacore.
            grid=(num_n_tiles, num_s_blocks),
            in_specs=[
                pl.BlockSpec((s_blk * f_pad, n_pad), lambda j, s: (s, 0)),  # x (slices batched)
                pl.BlockSpec((n_pad, tile_n), lambda j, s: (0, j)),         # A_hat^T columns
                pl.BlockSpec((o_pad, f_pad), lambda j, s: (0, 0)),          # W^T (resident)
                pl.BlockSpec((o_pad, 1), lambda j, s: (0, 0)),              # bias
            ],
            out_specs=pl.BlockSpec((s_blk, o_pad, tile_n),
                                   lambda j, s: (s, 0, j)),
        ),
        compiler_params=pltpu.CompilerParams(
            dimension_semantics=("parallel", "parallel"),
        ),
    )(xp2d, atp, wtp, bp)

    return out[:S, :O, :N]


def make_normalized_adjacency(key, n_nodes):
    """Random undirected graph -> D^-1/2 (A + I) D^-1/2 (DGL GraphConv norm='both')."""
    raw = jax.random.bernoulli(key, p=0.3, shape=(n_nodes, n_nodes)).astype(jnp.float32)
    adj = jnp.maximum(raw, raw.T)
    adj = adj + jnp.eye(n_nodes, dtype=jnp.float32)          # self loops
    deg = jnp.sum(adj, axis=1)
    d_inv_sqrt = 1.0 / jnp.sqrt(deg)
    return adj * d_inv_sqrt[:, None] * d_inv_sqrt[None, :]


if __name__ == "__main__":
    key = jax.random.PRNGKey(0)
    k_x, k_a, k_w, k_b = jax.random.split(key, 4)

    S, F, N, O = 2, 8, 16, 32   # slices, in_feats, nodes, out_feat

    x = jax.random.normal(k_x, (S, F, N), dtype=jnp.float32)
    a_hat = make_normalized_adjacency(k_a, N)
    w = jax.random.normal(k_w, (F, O), dtype=jnp.float32) * (2.0 / (F + O)) ** 0.5
    b = 0.1 * jax.random.normal(k_b, (O,), dtype=jnp.float32)

    params, meta = prepare_graphsage_params(a_hat, w, b)   # one-time pad/cast
    out = graphsage_forward(x, params, meta)
    jax.block_until_ready(out)

    # Pure-JAX f32 reference: ReLU(A_hat @ X_nf @ W + b), then back to (S, O, N).
    x_nf = jnp.transpose(x, (0, 2, 1))                                   # (S, N, F)
    ref = jnp.maximum(jnp.einsum("nm,smf,fo->sno", a_hat, x_nf, w) + b, 0.0)
    ref = jnp.transpose(ref, (0, 2, 1))                                  # (S, O, N)

    assert out.shape == (S, O, N)
    # bf16 MXU operands (aggregation) with f32 accumulation / f32 projection.
    assert jnp.allclose(out, ref, atol=2e-2, rtol=5e-2)

    print("KERNEL_OK")
</pallas_src>

<mosaic_0001>
module attributes {stable_mosaic.version = 11 : i64} {
  func.func @graphsage_kernel(%arg0: i32, %arg1: i32, %arg2: memref<32x128xbf16, #tpu.memory_space<vmem>>, %arg3: memref<128x128xbf16, #tpu.memory_space<vmem>>, %arg4: memref<32x16xf32, #tpu.memory_space<vmem>>, %arg5: memref<32x1xf32, #tpu.memory_space<vmem>>, %arg6: memref<2x32x128xf32, #tpu.memory_space<vmem>>) attributes {dimension_semantics = [#tpu.dimension_semantics<parallel>, #tpu.dimension_semantics<parallel>], iteration_bounds = array<i64: 1, 1>, scalar_prefetch = 0 : i64, scratch_operands = 0 : i64, tpu.core_type = #tpu.core_type<tc>, window_params = [{transform_indices = @transform_0, window_bounds = array<i64: 32, 128>}, {transform_indices = @transform_1, window_bounds = array<i64: 128, 128>}, {pipeline_mode = #tpu.pipeline_mode<synchronous>, transform_indices = @transform_2, window_bounds = array<i64: 32, 16>}, {pipeline_mode = #tpu.pipeline_mode<synchronous>, transform_indices = @transform_3, window_bounds = array<i64: 32, 1>}, {transform_indices = @transform_4, window_bounds = array<i64: 2, 32, 128>}]} {
    %c0 = arith.constant 0 : index
    %c0_0 = arith.constant 0 : index
    %0 = vector.load %arg2[%c0, %c0_0] : memref<32x128xbf16, #tpu.memory_space<vmem>>, vector<32x128xbf16>
    %c0_1 = arith.constant 0 : index
    %c0_2 = arith.constant 0 : index
    %1 = vector.load %arg3[%c0_1, %c0_2] : memref<128x128xbf16, #tpu.memory_space<vmem>>, vector<128x128xbf16>
    %cst = arith.constant dense<0.000000e+00> : vector<32x128xf32>
    %2 = tpu.matmul %0, %1, %cst {dimension_numbers = #tpu.dot_dimension_numbers<[1], [0], [0], [1], [0, 0, 1, 1], [], []>} : vector<32x128xbf16>, vector<128x128xbf16>, vector<32x128xf32> -> vector<32x128xf32>
    %c0_3 = arith.constant 0 : index
    %c0_4 = arith.constant 0 : index
    %3 = vector.load %arg5[%c0_3, %c0_4] : memref<32x1xf32, #tpu.memory_space<vmem>>, vector<32x1xf32>
    %4 = vector.extract_strided_slice %2 {offsets = [0, 0], sizes = [16, 128], strides = [1, 1]} : vector<32x128xf32> to vector<16x128xf32>
    %c0_5 = arith.constant 0 : index
    %c0_6 = arith.constant 0 : index
    %5 = vector.load %arg4[%c0_5, %c0_6] : memref<32x16xf32, #tpu.memory_space<vmem>>, vector<32x16xf32>
    %cst_7 = arith.constant dense<0.000000e+00> : vector<32x128xf32>
    %6 = tpu.matmul %5, %4, %cst_7 {dimension_numbers = #tpu.dot_dimension_numbers<[1], [0], [0], [1], [0, 0, 1, 1], [], []>} : vector<32x16xf32>, vector<16x128xf32>, vector<32x128xf32> -> vector<32x128xf32>
    %7 = vector.broadcast %3 : vector<32x1xf32> to vector<32x128xf32>
    %8 = arith.addf %6, %7 : vector<32x128xf32>
    %cst_8 = arith.constant 0.000000e+00 : f32
    %9 = vector.broadcast %cst_8 : f32 to vector<32x128xf32>
    %10 = arith.maximumf %8, %9 : vector<32x128xf32>
    %c0_9 = arith.constant 0 : index
    %c0_10 = arith.constant 0 : index
    %c0_11 = arith.constant 0 : index
    %11 = vector.load %arg6[%c0_9, %c0_10, %c0_11] : memref<2x32x128xf32, #tpu.memory_space<vmem>>, vector<1x32x128xf32>
    %12 = vector.shape_cast %11 : vector<1x32x128xf32> to vector<32x128xf32>
    %13 = vector.shape_cast %10 : vector<32x128xf32> to vector<1x32x128xf32>
    tpu.vector_store %arg6[%c0_9, %c0_10, %c0_11], %13 {strides = array<i32>} : memref<2x32x128xf32, #tpu.memory_space<vmem>>, vector<1x32x128xf32>,
    %14 = vector.extract_strided_slice %2 {offsets = [16, 0], sizes = [16, 128], strides = [1, 1]} : vector<32x128xf32> to vector<16x128xf32>
    %c0_12 = arith.constant 0 : index
    %c0_13 = arith.constant 0 : index
    %15 = vector.load %arg4[%c0_12, %c0_13] : memref<32x16xf32, #tpu.memory_space<vmem>>, vector<32x16xf32>
    %cst_14 = arith.constant dense<0.000000e+00> : vector<32x128xf32>
    %16 = tpu.matmul %15, %14, %cst_14 {dimension_numbers = #tpu.dot_dimension_numbers<[1], [0], [0], [1], [0, 0, 1, 1], [], []>} : vector<32x16xf32>, vector<16x128xf32>, vector<32x128xf32> -> vector<32x128xf32>
    %17 = vector.broadcast %3 : vector<32x1xf32> to vector<32x128xf32>
    %18 = arith.addf %16, %17 : vector<32x128xf32>
    %cst_15 = arith.constant 0.000000e+00 : f32
    %19 = vector.broadcast %cst_15 : f32 to vector<32x128xf32>
    %20 = arith.maximumf %18, %19 : vector<32x128xf32>
    %c1 = arith.constant 1 : index
    %c0_16 = arith.constant 0 : index
    %c0_17 = arith.constant 0 : index
    %21 = vector.load %arg6[%c1, %c0_16, %c0_17] : memref<2x32x128xf32, #tpu.memory_space<vmem>>, vector<1x32x128xf32>
    %22 = vector.shape_cast %21 : vector<1x32x128xf32> to vector<32x128xf32>
    %23 = vector.shape_cast %20 : vector<32x128xf32> to vector<1x32x128xf32>
    tpu.vector_store %arg6[%c1, %c0_16, %c0_17], %23 {strides = array<i32>} : memref<2x32x128xf32, #tpu.memory_space<vmem>>, vector<1x32x128xf32>,
    return
  }
  func.func @transform_0(%arg0: i32, %arg1: i32) -> (i32, i32) {
    %c0_i32 = arith.constant 0 : i32
    %c0_i32_0 = arith.constant 0 : i32
    return %arg1, %c0_i32 : i32, i32
  }
  func.func @transform_1(%arg0: i32, %arg1: i32) -> (i32, i32) {
    %c0_i32 = arith.constant 0 : i32
    %c0_i32_0 = arith.constant 0 : i32
    return %c0_i32, %arg0 : i32, i32
  }
  func.func @transform_2(%arg0: i32, %arg1: i32) -> (i32, i32) {
    %c0_i32 = arith.constant 0 : i32
    %c0_i32_0 = arith.constant 0 : i32
    %c0_i32_1 = arith.constant 0 : i32
    return %c0_i32, %c0_i32_0 : i32, i32
  }
  func.func @transform_3(%arg0: i32, %arg1: i32) -> (i32, i32) {
    %c0_i32 = arith.constant 0 : i32
    %c0_i32_0 = arith.constant 0 : i32
    %c0_i32_1 = arith.constant 0 : i32
    return %c0_i32, %c0_i32_0 : i32, i32
  }
  func.func @transform_4(%arg0: i32, %arg1: i32) -> (i32, i32, i32) {
    %c0_i32 = arith.constant 0 : i32
    %c0_i32_0 = arith.constant 0 : i32
    return %arg1, %c0_i32, %arg0 : i32, i32, i32
  }
}

</mosaic_0001>

<llo_original>
// kernel: tpu_custom_call.1
$region0: #{tpu_custom_call.1}
  #allocation0 [shape = 'u32[]', space=smem, size = 0x4, offset = 0x4, fixed_abs, tag = 'smem constant byte address 0x4 - core index']
  #allocation1 [shape = 'u32[144,128]{1,0:T(1,128)}', space=vmem, size = 0x12000, scoped, tag = 'internal scratch']
  %s0 = inlined_call_operand.vmem [shape: bf16[32,128], index: 0, kind: input, shape index: {}]
  %s1 = inlined_call_operand.vmem [shape: bf16[128,128], index: 1, kind: input, shape index: {}]
  %s2 = inlined_call_operand.vmem [shape: f32[32,16], index: 2, kind: input, shape index: {}]
  %s3 = inlined_call_operand.vmem [shape: f32[32,1], index: 3, kind: input, shape index: {}]
  %s4 = inlined_call_operand.hbm [shape: f32[2,32,128], index: 4, kind: output, shape index: {}]
  %s5 = sld [smem:[#allocation0]]
  $region26: #{tpu_custom_call.1} parent=0
    _
  %s7 = ssub.s32 1, %s5
  %s8 = scalar_select 0, %s7, %s5
  $region1: #{tpu_custom_call.1} parent=0
    #allocation2 [shape = 'u8[32768]{0}', space=vmem, size = 0x8000, scoped, tag = 'output window, operand 0, single buffered']
    #allocation3 [shape = 's32[1]{0}', space=sflag, size = 0x4, scoped, tag = 'scoped memory for tpu_custom_call.1']
    %9 = vsyncpa [#allocation3], 0
    // Predicated region
    $region2: #{tpu_custom_call.1} parent=1 // pred_check
      _
    $region3: #{tpu_custom_call.1} parent=1 // pred_check_branch
      %11 = sbr.rel (0) target = $region5
    $region4: #{tpu_custom_call.1} parent=1 // pred_region
      _
    $region5: #{tpu_custom_call.1} parent=1 // pred_fallthru
      _
    // Predicated region
    $region6: #{tpu_custom_call.1} parent=1 // pred_check
      _
    $region7: #{tpu_custom_call.1} parent=1 // pred_check_branch
      %13 = sbr.rel (0) target = $region9
    $region8: #{tpu_custom_call.1} parent=1 // pred_region
      _
    $region9: #{tpu_custom_call.1} parent=1 // pred_fallthru
      _
    // Predicated region
    $region10: #{tpu_custom_call.1} parent=1 // pred_check
      _
    $region11: #{tpu_custom_call.1} parent=1 // pred_check_branch
      %15 = sbr.rel (0) target = $region13
    $region12: #{tpu_custom_call.1} parent=1 // pred_region
      _
    $region13: #{tpu_custom_call.1} parent=1 // pred_fallthru
      _
    // Predicated region
    $region14: #{tpu_custom_call.1} parent=1 // pred_check
      _
    $region15: #{tpu_custom_call.1} parent=1 // pred_check_branch
      %17 = sbr.rel (0) target = $region17
    $region16: #{tpu_custom_call.1} parent=1 // pred_region
      _
    $region17: #{tpu_custom_call.1} parent=1 // pred_fallthru
      _
    %v19 = vld [vmem:[%s0] sm:$0xf]
    %v20 = vld [vmem:[%s0 + $0x4] sm:$0xf]
    %v21 = vld [vmem:[%s0 + $0x8] sm:$0xf]
    %v22 = vld [vmem:[%s0 + $0xc] sm:$0xf]
    %v23 = vld [vmem:[%s1] sm:$0xf]
    %v24 = vld [vmem:[%s1 + $0x4] sm:$0xf]
    %v25 = vld [vmem:[%s1 + $0x8] sm:$0xf]
    %v26 = vld [vmem:[%s1 + $0xc] sm:$0xf]
    %v27 = vld [vmem:[%s1 + $0x10] sm:$0xf]
    %v28 = vld [vmem:[%s1 + $0x14] sm:$0xf]
    %v29 = vld [vmem:[%s1 + $0x18] sm:$0xf]
    %v30 = vld [vmem:[%s1 + $0x1c] sm:$0xf]
    %v31 = vld [vmem:[%s1 + $0x20] sm:$0xf]
    %v32 = vld [vmem:[%s1 + $0x24] sm:$0xf]
    %v33 = vld [vmem:[%s1 + $0x28] sm:$0xf]
    %v34 = vld [vmem:[%s1 + $0x2c] sm:$0xf]
    %v35 = vld [vmem:[%s1 + $0x30] sm:$0xf]
    %v36 = vld [vmem:[%s1 + $0x34] sm:$0xf]
    %v37 = vld [vmem:[%s1 + $0x38] sm:$0xf]
    %v38 = vld [vmem:[%s1 + $0x3c] sm:$0xf]
    %v43 = vunpack.c.l.b16 %v19
    %v44 = vunpack.c.l.b16 %v20
    %v45 = vunpack.c.l.b16 %v21
    %v46 = vunpack.c.l.b16 %v22
    %v47 = vpack.c.b16 %v44, %v43
    %v48 = vpack.c.b16 %v46, %v45
    %v67 = vunpack.c.l.b16 %v23
    %v68 = vunpack.c.l.b16 %v24
    %v69 = vunpack.c.l.b16 %v25
    %v70 = vunpack.c.l.b16 %v26
    %v71 = vunpack.c.l.b16 %v27
    %v72 = vunpack.c.l.b16 %v28
    %v73 = vunpack.c.l.b16 %v29
    %v74 = vunpack.c.l.b16 %v30
    %v75 = vunpack.c.l.b16 %v31
    %v76 = vunpack.c.l.b16 %v32
    %v77 = vunpack.c.l.b16 %v33
    %v78 = vunpack.c.l.b16 %v34
    %v79 = vunpack.c.l.b16 %v35
    %v80 = vunpack.c.l.b16 %v36
    %v81 = vunpack.c.l.b16 %v37
    %v82 = vunpack.c.l.b16 %v38
    %v83 = vpack.c.b16 %v68, %v67
    %v84 = vpack.c.b16 %v70, %v69
    %v85 = vpack.c.b16 %v72, %v71
    %v86 = vpack.c.b16 %v74, %v73
    %v87 = vpack.c.b16 %v76, %v75
    %v88 = vpack.c.b16 %v78, %v77
    %v89 = vpack.c.b16 %v80, %v79
    %v90 = vpack.c.b16 %v82, %v81
    %99 = vmatprep.subr.bf16.mxu0 0
    %100 = vmatpush1.bf16.msra.mxu0 %v90
    %101 = vmatprep.subr.bf16.mxu0 0
    %102 = vmatpush1.bf16.msra.mxu0 %v89
    %103 = vmatprep.subr.bf16.mxu0 0
    %104 = vmatpush1.bf16.msra.mxu0 %v88
    %105 = vmatprep.subr.bf16.mxu0 0
    %106 = vmatpush1.bf16.msra.mxu0 %v87
    %107 = vmatprep.subr.bf16.mxu0 0
    %108 = vmatpush1.bf16.msra.mxu0 %v86
    %109 = vmatprep.subr.bf16.mxu0 0
    %110 = vmatpush1.bf16.msra.mxu0 %v85
    %111 = vmatprep.subr.bf16.mxu0 0
    %112 = vmatpush1.bf16.msra.mxu0 %v84
    %113 = vmatprep.subr.bf16.mxu0 0
    %114 = vmatpush1.bf16.msra.mxu0 %v83
    %115 = vmatprep.subr.bf16.mxu0 0
    %116 = vmatpush2.bf16.msra.mxu0 0
    %117 = vmatprep.subr.bf16.mxu0 0
    %118 = vmatpush2.bf16.msra.mxu0 0
    %119 = vmatprep.subr.bf16.mxu0 0
    %120 = vmatpush2.bf16.msra.mxu0 0
    %121 = vmatprep.subr.bf16.mxu0 0
    %122 = vmatpush2.bf16.msra.mxu0 0
    %123 = vmatprep.subr.bf16.mxu0 0
    %124 = vmatpush2.bf16.msra.mxu0 0
    %125 = vmatprep.subr.bf16.mxu0 0
    %126 = vmatpush2.bf16.msra.mxu0 0
    %127 = vmatprep.subr.bf16.mxu0 0
    %128 = vmatpush2.bf16.msra.mxu0 0
    %129 = vmatprep.subr.bf16.mxu0 0
    %130 = vmatpush2.bf16.msra.mxu0 0
    %131 = vmatprep.mubr.bf16.mxu0 0
    %132 = vmatmul.mubr.bf16.gmra.mxu0 %v47
    %v133 = vpop.f32.mrf.mxu0
    %v134 = vadd.f32 0.0, %v133
    %v135 = vpop.f32.mrf.mxu0
    %v136 = vpop.f32.mrf.mxu0
    %v137 = vadd.f32 0.0, %v136
    %v138 = vpop.f32.mrf.mxu0
    %139 = vmatprep.mubr.bf16.mxu0 0
    %140 = vmatmul.mubr.bf16.gmra.mxu0 %v48
    %v141 = vpop.f32.mrf.mxu0
    %v142 = vadd.f32 0.0, %v141
    %v143 = vpop.f32.mrf.mxu0
    %v144 = vpop.f32.mrf.mxu0
    %v145 = vadd.f32 0.0, %v144
    %v146 = vpop.f32.mrf.mxu0
    %147 = vdwg.mxu0
    %v148 = vld [vmem:[%s3] sm:$0xff]
    %v149 = vld [vmem:[%s3 + $0x8] sm:$0xff]
    %v150 = vld [vmem:[%s3 + $0x10] sm:$0xff]
    %v151 = vld [vmem:[%s3 + $0x18] sm:$0xff]
    %v152 = vld [vmem:[%s2] sm:$0xff]
    %v153 = vld [vmem:[%s2 + $0x8] sm:$0xff]
    %v154 = vld [vmem:[%s2 + $0x10] sm:$0xff]
    %v155 = vld [vmem:[%s2 + $0x18] sm:$0xff]
    %157 = vset.pattern.permute.xlu0 0
    %158 = vperm.xlu0 %157, %v148
    %v159 = vpop.permute.xlu0 %158
    %162 = vset.pattern.permute.xlu0 0
    %163 = vperm.xlu0 %162, %v149
    %v164 = vpop.permute.xlu0 %163
    %167 = vset.pattern.permute.xlu0 0
    %168 = vperm.xlu0 %167, %v150
    %v169 = vpop.permute.xlu0 %168
    %172 = vset.pattern.permute.xlu0 0
    %173 = vperm.xlu0 %172, %v151
    %v174 = vpop.permute.xlu0 %173
    %vm176 = vcmask 130048
    %v178 = vsel %vm176, %v152, 0
    %v181 = vsel %vm176, %v153, 0
    %v184 = vsel %vm176, %v154, 0
    %v187 = vsel %vm176, %v155, 0
    %189 = vmatprep.subr.mxu0 0.0
    %190 = vmatpush1.msra.mxu0 0.0
    %191 = vmatprep.subr.mxu0 0.0
    %192 = vmatpush1.msra.mxu0 0.0
    %193 = vmatprep.subr.mxu0 0.0
    %194 = vmatpush1.msra.mxu0 0.0
    %195 = vmatprep.subr.mxu0 0.0
    %196 = vmatpush1.msra.mxu0 0.0
    %197 = vmatprep.subr.mxu0 0.0
    %198 = vmatpush1.msra.mxu0 0.0
    %199 = vmatprep.subr.mxu0 0.0
    %200 = vmatpush1.msra.mxu0 0.0
    %201 = vmatprep.subr.mxu0 0.0
    %202 = vmatpush1.msra.mxu0 0.0
    %203 = vmatprep.subr.mxu0 0.0
    %204 = vmatpush1.msra.mxu0 0.0
    %205 = vmatprep.subr.mxu0 0.0
    %206 = vmatpush1.msra.mxu0 0.0
    %207 = vmatprep.subr.mxu0 0.0
    %208 = vmatpush1.msra.mxu0 0.0
    %209 = vmatprep.subr.mxu0 0.0
    %210 = vmatpush1.msra.mxu0 0.0
    %211 = vmatprep.subr.mxu0 0.0
    %212 = vmatpush1.msra.mxu0 0.0
    %213 = vmatprep.subr.mxu0 0.0
    %214 = vmatpush1.msra.mxu0 0.0
    %215 = vmatprep.subr.mxu0 0.0
    %216 = vmatpush1.msra.mxu0 0.0
    %217 = vmatprep.subr.mxu0 0.0
    %218 = vmatpush1.msra.mxu0 %v137
    %219 = vmatprep.subr.mxu0 0.0
    %220 = vmatpush1.msra.mxu0 %v134
    %221 = vmatprep.subr.mxu0 0.0
    %222 = vmatpush2.msra.mxu0 0.0
    %223 = vmatprep.subr.mxu0 0.0
    %224 = vmatpush2.msra.mxu0 0.0
    %225 = vmatprep.subr.mxu0 0.0
    %226 = vmatpush2.msra.mxu0 0.0
    %227 = vmatprep.subr.mxu0 0.0
    %228 = vmatpush2.msra.mxu0 0.0
    %229 = vmatprep.subr.mxu0 0.0
    %230 = vmatpush2.msra.mxu0 0.0
    %231 = vmatprep.subr.mxu0 0.0
    %232 = vmatpush2.msra.mxu0 0.0
    %233 = vmatprep.subr.mxu0 0.0
    %234 = vmatpush2.msra.mxu0 0.0
    %235 = vmatprep.subr.mxu0 0.0
    %236 = vmatpush2.msra.mxu0 0.0
    %237 = vmatprep.subr.mxu0 0.0
    %238 = vmatpush2.msra.mxu0 0.0
    %239 = vmatprep.subr.mxu0 0.0
    %240 = vmatpush2.msra.mxu0 0.0
    %241 = vmatprep.subr.mxu0 0.0
    %242 = vmatpush2.msra.mxu0 0.0
    %243 = vmatprep.subr.mxu0 0.0
    %244 = vmatpush2.msra.mxu0 0.0
    %245 = vmatprep.subr.mxu0 0.0
    %246 = vmatpush2.msra.mxu0 0.0
    %247 = vmatprep.subr.mxu0 0.0
    %248 = vmatpush2.msra.mxu0 0.0
    %249 = vmatprep.subr.mxu0 0.0
    %250 = vmatpush2.msra.mxu0 0.0
    %251 = vmatprep.subr.mxu0 0.0
    %252 = vmatpush2.msra.mxu0 0.0
    %253 = vmatprep.mubr.f32.mxu0 0.0
    %254 = vmatmul.mubr.f32.gmra.mxu0 %v178
    %v255 = vpop.f32.mrf.mxu0
    %v256 = vadd.f32 %v159, %v255
    %v257 = vpop.f32.mrf.mxu0
    %258 = vmatprep.mubr.f32.mxu0 0.0
    %259 = vmatmul.mubr.f32.gmra.mxu0 %v181
    %v260 = vpop.f32.mrf.mxu0
    %v261 = vadd.f32 %v164, %v260
    %v262 = vpop.f32.mrf.mxu0
    %263 = vmatprep.mubr.f32.mxu0 0.0
    %264 = vmatmul.mubr.f32.gmra.mxu0 %v184
    %v265 = vpop.f32.mrf.mxu0
    %v266 = vadd.f32 %v169, %v265
    %v267 = vpop.f32.mrf.mxu0
    %268 = vmatprep.mubr.f32.mxu0 0.0
    %269 = vmatmul.mubr.f32.gmra.mxu0 %v187
    %v270 = vpop.f32.mrf.mxu0
    %v271 = vadd.f32 %v174, %v270
    %v272 = vpop.f32.mrf.mxu0
    %273 = vdwg.mxu0
    %v274 = vmax.f32 %v256, 0.0
    %v275 = vmax.f32 %v261, 0.0
    %v276 = vmax.f32 %v266, 0.0
    %v277 = vmax.f32 %v271, 0.0
    %278 = vst [vmem:[#allocation2] sm:$0xff] %v274
    %279 = vst [vmem:[#allocation2 + $0x8] sm:$0xff] %v275
    %280 = vst [vmem:[#allocation2 + $0x10] sm:$0xff] %v276
    %281 = vst [vmem:[#allocation2 + $0x18] sm:$0xff] %v277
    %v282 = vld [vmem:[%s2] sm:$0xff]
    %v283 = vld [vmem:[%s2 + $0x8] sm:$0xff]
    %v284 = vld [vmem:[%s2 + $0x10] sm:$0xff]
    %v285 = vld [vmem:[%s2 + $0x18] sm:$0xff]
    %v287 = vsel %vm176, %v282, 0
    %v290 = vsel %vm176, %v283, 0
    %v293 = vsel %vm176, %v284, 0
    %v296 = vsel %vm176, %v285, 0
    %298 = vmatprep.subr.mxu0 0.0
    %299 = vmatpush1.msra.mxu0 0.0
    %300 = vmatprep.subr.mxu0 0.0
    %301 = vmatpush1.msra.mxu0 0.0
    %302 = vmatprep.subr.mxu0 0.0
    %303 = vmatpush1.msra.mxu0 0.0
    %304 = vmatprep.subr.mxu0 0.0
    %305 = vmatpush1.msra.mxu0 0.0
    %306 = vmatprep.subr.mxu0 0.0
    %307 = vmatpush1.msra.mxu0 0.0
    %308 = vmatprep.subr.mxu0 0.0
    %309 = vmatpush1.msra.mxu0 0.0
    %310 = vmatprep.subr.mxu0 0.0
    %311 = vmatpush1.msra.mxu0 0.0
    %312 = vmatprep.subr.mxu0 0.0
    %313 = vmatpush1.msra.mxu0 0.0
    %314 = vmatprep.subr.mxu0 0.0
    %315 = vmatpush1.msra.mxu0 0.0
    %316 = vmatprep.subr.mxu0 0.0
    %317 = vmatpush1.msra.mxu0 0.0
    %318 = vmatprep.subr.mxu0 0.0
    %319 = vmatpush1.msra.mxu0 0.0
    %320 = vmatprep.subr.mxu0 0.0
    %321 = vmatpush1.msra.mxu0 0.0
    %322 = vmatprep.subr.mxu0 0.0
    %323 = vmatpush1.msra.mxu0 0.0
    %324 = vmatprep.subr.mxu0 0.0
    %325 = vmatpush1.msra.mxu0 0.0
    %326 = vmatprep.subr.mxu0 0.0
    %327 = vmatpush1.msra.mxu0 %v145
    %328 = vmatprep.subr.mxu0 0.0
    %329 = vmatpush1.msra.mxu0 %v142
    %330 = vmatprep.subr.mxu0 0.0
    %331 = vmatpush2.msra.mxu0 0.0
    %332 = vmatprep.subr.mxu0 0.0
    %333 = vmatpush2.msra.mxu0 0.0
    %334 = vmatprep.subr.mxu0 0.0
    %335 = vmatpush2.msra.mxu0 0.0
    %336 = vmatprep.subr.mxu0 0.0
    %337 = vmatpush2.msra.mxu0 0.0
    %338 = vmatprep.subr.mxu0 0.0
    %339 = vmatpush2.msra.mxu0 0.0
    %340 = vmatprep.subr.mxu0 0.0
    %341 = vmatpush2.msra.mxu0 0.0
    %342 = vmatprep.subr.mxu0 0.0
    %343 = vmatpush2.msra.mxu0 0.0
    %344 = vmatprep.subr.mxu0 0.0
    %345 = vmatpush2.msra.mxu0 0.0
    %346 = vmatprep.subr.mxu0 0.0
    %347 = vmatpush2.msra.mxu0 0.0
    %348 = vmatprep.subr.mxu0 0.0
    %349 = vmatpush2.msra.mxu0 0.0
    %350 = vmatprep.subr.mxu0 0.0
    %351 = vmatpush2.msra.mxu0 0.0
    %352 = vmatprep.subr.mxu0 0.0
    %353 = vmatpush2.msra.mxu0 0.0
    %354 = vmatprep.subr.mxu0 0.0
    %355 = vmatpush2.msra.mxu0 0.0
    %356 = vmatprep.subr.mxu0 0.0
    %357 = vmatpush2.msra.mxu0 0.0
    %358 = vmatprep.subr.mxu0 0.0
    %359 = vmatpush2.msra.mxu0 0.0
    %360 = vmatprep.subr.mxu0 0.0
    %361 = vmatpush2.msra.mxu0 0.0
    %362 = vmatprep.mubr.f32.mxu0 0.0
    %363 = vmatmul.mubr.f32.gmra.mxu0 %v287
    %v364 = vpop.f32.mrf.mxu0
    %v365 = vadd.f32 %v159, %v364
    %v366 = vpop.f32.mrf.mxu0
    %367 = vmatprep.mubr.f32.mxu0 0.0
    %368 = vmatmul.mubr.f32.gmra.mxu0 %v290
    %v369 = vpop.f32.mrf.mxu0
    %v370 = vadd.f32 %v164, %v369
    %v371 = vpop.f32.mrf.mxu0
    %372 = vmatprep.mubr.f32.mxu0 0.0
    %373 = vmatmul.mubr.f32.gmra.mxu0 %v293
    %v374 = vpop.f32.mrf.mxu0
    %v375 = vadd.f32 %v169, %v374
    %v376 = vpop.f32.mrf.mxu0
    %377 = vmatprep.mubr.f32.mxu0 0.0
    %378 = vmatmul.mubr.f32.gmra.mxu0 %v296
    %v379 = vpop.f32.mrf.mxu0
    %v380 = vadd.f32 %v174, %v379
    %v381 = vpop.f32.mrf.mxu0
    %382 = vdwg.mxu0
    %v383 = vmax.f32 %v365, 0.0
    %v384 = vmax.f32 %v370, 0.0
    %v385 = vmax.f32 %v375, 0.0
    %v386 = vmax.f32 %v380, 0.0
    %s387 = scalar_lea.vmem [#allocation2], 32
    %388 = vst [vmem:[%s387] sm:$0xff] %v383
    %389 = vst [vmem:[%s387 + $0x8] sm:$0xff] %v384
    %390 = vst [vmem:[%s387 + $0x10] sm:$0xff] %v385
    %391 = vst [vmem:[%s387 + $0x18] sm:$0xff] %v386
    // Predicated region
    $region18: #{tpu_custom_call.1} parent=1 // pred_check
      _
    $region19: #{tpu_custom_call.1} parent=1 // pred_check_branch
      %393 = sbr.rel (0) target = $region21
    $region20: #{tpu_custom_call.1} parent=1 // pred_region
      %s395 = ssub.s32 1024, 1024
      %396 = vsyncadd [#allocation3], %s395
      %s397 = sshll.u32 [#allocation2], 4
      %s398 = int_to_ptr.vmem [resolvable:$true] %s397
      %403 = dma.vmem_to_hbm [thread:$0]  %s398, 1024, %s4, [#allocation3], 128, 128, 8
    $region21: #{tpu_custom_call.1} parent=1 // pred_fallthru
      _
    // Predicated region
    $region22: #{tpu_custom_call.1} parent=1 // pred_check
      _
    $region23: #{tpu_custom_call.1} parent=1 // pred_check_branch
      %405 = sbr.rel (0) target = $region25
    $region24: #{tpu_custom_call.1} parent=1 // pred_region
      %406 = dma.done [#allocation3], 1024
    $region25: #{tpu_custom_call.1} parent=1 // pred_fallthru
      _
    %407 = vsyncpa [#allocation3], 1

</llo_original>
